<compile_context>
chip_gen: v7x
topology: tpu7x:2x2x1
jax: 0.10.0
libtpu: 0.0.40
codegen_flags: <defaults>
</compile_context>

<pallas_src>
import functools

import jax
import jax.numpy as jnp
from jax.experimental import pallas as pl
from jax.experimental.pallas import tpu as pltpu

_LANES = 128


def _cdiv(a, b):
    return -(-a // b)


def _round_up(a, b):
    return _cdiv(a, b) * b


def _shallow_kernel(x_ref, w_ref, b_ref, s_ref, off_ref, o_ref, *, H, D):
    # x_ref  : (D, TR, 128) VMEM -- batch tiled over sublanes x lanes (dense)
    # w_ref  : (H*D,)  SMEM      -- w_ref[j*D + d] = weights[d, j]
    # b_ref  : (H,)    SMEM      -- hidden-unit biases
    # s_ref  : (H,)    SMEM      -- hidden_unit_scales
    # off_ref: (1,)    SMEM      -- offset scalar
    # o_ref  : (TR, 128) VMEM    -- output tile
    xs = [x_ref[d] for d in range(D)]                      # D x (TR, 128), hoisted
    total = off_ref[0] + jnp.zeros_like(xs[0])             # (TR, 128)
    for j in range(H):                                     # fully unrolled (H=8)
        pre = xs[0] * w_ref[j * D]
        for d in range(1, D):
            pre = pre + xs[d] * w_ref[j * D + d]
        h = jnp.maximum(pre + b_ref[j], 0.0)               # ReLU(w_j . x + b_j)
        total = total + s_ref[j] * h                       # scale_j * h_j(x)
    # sigmoid(total) = 1 / (1 + exp(-total)); exp + approx reciprocal both on EUP.
    o_ref[...] = pl.reciprocal(1.0 + jnp.exp(-total), approx=True)


def _choose_row_tiling(n_rows, tr_max):
    """Pick (tile_rows, padded_rows) for the sublane (row-of-128-lanes) axis."""
    if n_rows <= 8:
        # Single full-extent tile (block dim == array dim, so no 8-divisibility
        # requirement); too little work to be worth splitting across cores.
        return n_rows, n_rows
    n_tiles = max(2, _cdiv(n_rows, tr_max))       # >=2 tiles -> both v7x TCs get work
    tr = _round_up(_cdiv(n_rows, n_tiles), 8)     # sublane-aligned tile
    return tr, tr * n_tiles


@functools.partial(jax.jit, static_argnames=("tr_max",))
def shallow_network_forward(x, weights, biases, scales, offset, *, tr_max=2048):
    """x: (B, D); weights: (D, H); biases: (H,); scales: (H,); offset: scalar.

    Returns y of shape (B,), matching the torch module's output.
    """
    B, D = x.shape
    H = weights.shape[1]

    n_rows = _cdiv(B, _LANES)                     # rows of 128 batch lanes
    tr, r_pad = _choose_row_tiling(n_rows, tr_max)
    b_pad = r_pad * _LANES

    # Layout prep: (B, D) -> (D, r_pad, 128), zero-padded tail.  Lives inside
    # the same jit as the pallas_call so it fuses into one cheap pass over x.
    xt = jnp.transpose(x.astype(jnp.float32))             # (D, B)
    xt = jnp.pad(xt, ((0, 0), (0, b_pad - B)))            # (D, b_pad)
    xt = xt.reshape(D, r_pad, _LANES)                      # (D, r_pad, 128)

    # Tiny parameters -> SMEM (scalar broadcast for free inside the kernel).
    w_flat = weights.T.astype(jnp.float32).reshape(H * D)  # [j*D + d] = weights[d, j]
    b_vec = biases.astype(jnp.float32).reshape(H)
    s_vec = scales.astype(jnp.float32).reshape(H)
    off = jnp.asarray(offset, jnp.float32).reshape(1)

    smem = pl.BlockSpec(memory_space=pltpu.MemorySpace.SMEM)
    kernel = functools.partial(_shallow_kernel, H=H, D=D)

    y = pl.pallas_call(
        kernel,
        out_shape=jax.ShapeDtypeStruct((r_pad, _LANES), jnp.float32),
        grid=(r_pad // tr,),
        in_specs=[
            pl.BlockSpec((D, tr, _LANES), lambda i: (0, i, 0)),  # x, auto double-buffered
            smem,                                                # weights
            smem,                                                # biases
            smem,                                                # scales
            smem,                                                # offset
        ],
        out_specs=pl.BlockSpec((tr, _LANES), lambda i: (i, 0)),
        compiler_params=pltpu.CompilerParams(
            dimension_semantics=("parallel",),     # v7x: shard batch tiles over both TCs
            vmem_limit_bytes=32 * 1024 * 1024,     # explicit, fits v5e/v6e/v7x with headroom
        ),
    )(xt, w_flat, b_vec, s_vec, off)

    return y.reshape(b_pad)[:B]


def reference_forward(x, weights, biases, scales, offset):
    hidden = jnp.maximum(x @ weights + biases[None, :], 0.0)   # (B, H)
    total = jnp.sum(scales[None, :] * hidden, axis=1)          # (B,)
    return jax.nn.sigmoid(offset + total)


if __name__ == "__main__":
    key = jax.random.PRNGKey(0)
    kx, kw, kb, ks, ko, kx2 = jax.random.split(key, 6)

    B = 8          # batch
    D = 2          # input features (x1, x2) per the HiddenUnit docstring
    H = 8          # num_hidden_units

    x = jax.random.normal(kx, (B, D), dtype=jnp.float32)
    weights = jax.random.uniform(kw, (D, H), dtype=jnp.float32)   # HiddenUnit weights
    biases = jax.random.uniform(kb, (H,), dtype=jnp.float32)      # HiddenUnit biases
    scales = jax.random.uniform(ks, (H,), dtype=jnp.float32)      # hidden_unit_scales
    offset = jax.random.uniform(ko, (), dtype=jnp.float32)        # offset

    # Small-shape check (single tile).
    y = shallow_network_forward(x, weights, biases, scales, offset)
    jax.block_until_ready(y)
    y_ref = reference_forward(x, weights, biases, scales, offset)
    assert y.shape == (B,)
    assert jnp.allclose(y, y_ref, atol=2e-3, rtol=2e-3)  # approx EUP reciprocal in sigmoid

    # Larger check exercising the multi-tile batch grid + tail padding.
    B2 = 4000
    x2 = jax.random.normal(kx2, (B2, D), dtype=jnp.float32)
    y2 = shallow_network_forward(x2, weights, biases, scales, offset)
    jax.block_until_ready(y2)
    y2_ref = reference_forward(x2, weights, biases, scales, offset)
    assert y2.shape == (B2,)
    assert jnp.allclose(y2, y2_ref, atol=2e-3, rtol=2e-3)

    print("KERNEL_OK")
</pallas_src>

<mosaic_0001>
module attributes {stable_mosaic.version = 11 : i64} {
  func.func @_shallow_kernel(%arg0: i32, %arg1: memref<2x1x128xf32, #tpu.memory_space<vmem>>, %arg2: memref<16xf32, #tpu.memory_space<smem>>, %arg3: memref<8xf32, #tpu.memory_space<smem>>, %arg4: memref<8xf32, #tpu.memory_space<smem>>, %arg5: memref<1xf32, #tpu.memory_space<smem>>, %arg6: memref<1x128xf32, #tpu.memory_space<vmem>>) attributes {dimension_semantics = [#tpu.dimension_semantics<parallel>], iteration_bounds = array<i64: 1>, scalar_prefetch = 0 : i64, scratch_operands = 0 : i64, tpu.core_type = #tpu.core_type<tc>, window_params = [{transform_indices = @transform_0, window_bounds = array<i64: 2, 1, 128>}, {transform_indices = @transform_1, window_bounds = array<i64: 16>}, {transform_indices = @transform_2, window_bounds = array<i64: 8>}, {transform_indices = @transform_3, window_bounds = array<i64: 8>}, {transform_indices = @transform_4, window_bounds = array<i64: 1>}, {transform_indices = @transform_5, window_bounds = array<i64: 1, 128>}]} {
    %c0 = arith.constant 0 : index
    %c0_0 = arith.constant 0 : index
    %c0_1 = arith.constant 0 : index
    %0 = vector.load %arg1[%c0, %c0_0, %c0_1] : memref<2x1x128xf32, #tpu.memory_space<vmem>>, vector<1x1x128xf32>
    %1 = vector.shape_cast %0 : vector<1x1x128xf32> to vector<1x128xf32>
    %c1 = arith.constant 1 : index
    %c0_2 = arith.constant 0 : index
    %c0_3 = arith.constant 0 : index
    %2 = vector.load %arg1[%c1, %c0_2, %c0_3] : memref<2x1x128xf32, #tpu.memory_space<vmem>>, vector<1x1x128xf32>
    %3 = vector.shape_cast %2 : vector<1x1x128xf32> to vector<1x128xf32>
    %c0_4 = arith.constant 0 : index
    %4 = memref.load %arg5[%c0_4] : memref<1xf32, #tpu.memory_space<smem>>
    %cst = arith.constant 0.000000e+00 : f32
    %5 = vector.broadcast %cst : f32 to vector<1x128xf32>
    %6 = vector.broadcast %4 : f32 to vector<1x128xf32>
    %7 = arith.addf %6, %5 : vector<1x128xf32>
    %c0_5 = arith.constant 0 : index
    %8 = memref.load %arg2[%c0_5] : memref<16xf32, #tpu.memory_space<smem>>
    %9 = vector.broadcast %8 : f32 to vector<1x128xf32>
    %10 = arith.mulf %1, %9 : vector<1x128xf32>
    %c1_6 = arith.constant 1 : index
    %11 = memref.load %arg2[%c1_6] : memref<16xf32, #tpu.memory_space<smem>>
    %12 = vector.broadcast %11 : f32 to vector<1x128xf32>
    %13 = arith.mulf %3, %12 : vector<1x128xf32>
    %14 = arith.addf %10, %13 : vector<1x128xf32>
    %c0_7 = arith.constant 0 : index
    %15 = memref.load %arg3[%c0_7] : memref<8xf32, #tpu.memory_space<smem>>
    %16 = vector.broadcast %15 : f32 to vector<1x128xf32>
    %17 = arith.addf %14, %16 : vector<1x128xf32>
    %cst_8 = arith.constant 0.000000e+00 : f32
    %18 = vector.broadcast %cst_8 : f32 to vector<1x128xf32>
    %19 = arith.maximumf %17, %18 : vector<1x128xf32>
    %c0_9 = arith.constant 0 : index
    %20 = memref.load %arg4[%c0_9] : memref<8xf32, #tpu.memory_space<smem>>
    %21 = vector.broadcast %20 : f32 to vector<1x128xf32>
    %22 = arith.mulf %21, %19 : vector<1x128xf32>
    %23 = arith.addf %7, %22 : vector<1x128xf32>
    %c2 = arith.constant 2 : index
    %24 = memref.load %arg2[%c2] : memref<16xf32, #tpu.memory_space<smem>>
    %25 = vector.broadcast %24 : f32 to vector<1x128xf32>
    %26 = arith.mulf %1, %25 : vector<1x128xf32>
    %c3 = arith.constant 3 : index
    %27 = memref.load %arg2[%c3] : memref<16xf32, #tpu.memory_space<smem>>
    %28 = vector.broadcast %27 : f32 to vector<1x128xf32>
    %29 = arith.mulf %3, %28 : vector<1x128xf32>
    %30 = arith.addf %26, %29 : vector<1x128xf32>
    %c1_10 = arith.constant 1 : index
    %31 = memref.load %arg3[%c1_10] : memref<8xf32, #tpu.memory_space<smem>>
    %32 = vector.broadcast %31 : f32 to vector<1x128xf32>
    %33 = arith.addf %30, %32 : vector<1x128xf32>
    %cst_11 = arith.constant 0.000000e+00 : f32
    %34 = vector.broadcast %cst_11 : f32 to vector<1x128xf32>
    %35 = arith.maximumf %33, %34 : vector<1x128xf32>
    %c1_12 = arith.constant 1 : index
    %36 = memref.load %arg4[%c1_12] : memref<8xf32, #tpu.memory_space<smem>>
    %37 = vector.broadcast %36 : f32 to vector<1x128xf32>
    %38 = arith.mulf %37, %35 : vector<1x128xf32>
    %39 = arith.addf %23, %38 : vector<1x128xf32>
    %c4 = arith.constant 4 : index
    %40 = memref.load %arg2[%c4] : memref<16xf32, #tpu.memory_space<smem>>
    %41 = vector.broadcast %40 : f32 to vector<1x128xf32>
    %42 = arith.mulf %1, %41 : vector<1x128xf32>
    %c5 = arith.constant 5 : index
    %43 = memref.load %arg2[%c5] : memref<16xf32, #tpu.memory_space<smem>>
    %44 = vector.broadcast %43 : f32 to vector<1x128xf32>
    %45 = arith.mulf %3, %44 : vector<1x128xf32>
    %46 = arith.addf %42, %45 : vector<1x128xf32>
    %c2_13 = arith.constant 2 : index
    %47 = memref.load %arg3[%c2_13] : memref<8xf32, #tpu.memory_space<smem>>
    %48 = vector.broadcast %47 : f32 to vector<1x128xf32>
    %49 = arith.addf %46, %48 : vector<1x128xf32>
    %cst_14 = arith.constant 0.000000e+00 : f32
    %50 = vector.broadcast %cst_14 : f32 to vector<1x128xf32>
    %51 = arith.maximumf %49, %50 : vector<1x128xf32>
    %c2_15 = arith.constant 2 : index
    %52 = memref.load %arg4[%c2_15] : memref<8xf32, #tpu.memory_space<smem>>
    %53 = vector.broadcast %52 : f32 to vector<1x128xf32>
    %54 = arith.mulf %53, %51 : vector<1x128xf32>
    %55 = arith.addf %39, %54 : vector<1x128xf32>
    %c6 = arith.constant 6 : index
    %56 = memref.load %arg2[%c6] : memref<16xf32, #tpu.memory_space<smem>>
    %57 = vector.broadcast %56 : f32 to vector<1x128xf32>
    %58 = arith.mulf %1, %57 : vector<1x128xf32>
    %c7 = arith.constant 7 : index
    %59 = memref.load %arg2[%c7] : memref<16xf32, #tpu.memory_space<smem>>
    %60 = vector.broadcast %59 : f32 to vector<1x128xf32>
    %61 = arith.mulf %3, %60 : vector<1x128xf32>
    %62 = arith.addf %58, %61 : vector<1x128xf32>
    %c3_16 = arith.constant 3 : index
    %63 = memref.load %arg3[%c3_16] : memref<8xf32, #tpu.memory_space<smem>>
    %64 = vector.broadcast %63 : f32 to vector<1x128xf32>
    %65 = arith.addf %62, %64 : vector<1x128xf32>
    %cst_17 = arith.constant 0.000000e+00 : f32
    %66 = vector.broadcast %cst_17 : f32 to vector<1x128xf32>
    %67 = arith.maximumf %65, %66 : vector<1x128xf32>
    %c3_18 = arith.constant 3 : index
    %68 = memref.load %arg4[%c3_18] : memref<8xf32, #tpu.memory_space<smem>>
    %69 = vector.broadcast %68 : f32 to vector<1x128xf32>
    %70 = arith.mulf %69, %67 : vector<1x128xf32>
    %71 = arith.addf %55, %70 : vector<1x128xf32>
    %c8 = arith.constant 8 : index
    %72 = memref.load %arg2[%c8] : memref<16xf32, #tpu.memory_space<smem>>
    %73 = vector.broadcast %72 : f32 to vector<1x128xf32>
    %74 = arith.mulf %1, %73 : vector<1x128xf32>
    %c9 = arith.constant 9 : index
    %75 = memref.load %arg2[%c9] : memref<16xf32, #tpu.memory_space<smem>>
    %76 = vector.broadcast %75 : f32 to vector<1x128xf32>
    %77 = arith.mulf %3, %76 : vector<1x128xf32>
    %78 = arith.addf %74, %77 : vector<1x128xf32>
    %c4_19 = arith.constant 4 : index
    %79 = memref.load %arg3[%c4_19] : memref<8xf32, #tpu.memory_space<smem>>
    %80 = vector.broadcast %79 : f32 to vector<1x128xf32>
    %81 = arith.addf %78, %80 : vector<1x128xf32>
    %cst_20 = arith.constant 0.000000e+00 : f32
    %82 = vector.broadcast %cst_20 : f32 to vector<1x128xf32>
    %83 = arith.maximumf %81, %82 : vector<1x128xf32>
    %c4_21 = arith.constant 4 : index
    %84 = memref.load %arg4[%c4_21] : memref<8xf32, #tpu.memory_space<smem>>
    %85 = vector.broadcast %84 : f32 to vector<1x128xf32>
    %86 = arith.mulf %85, %83 : vector<1x128xf32>
    %87 = arith.addf %71, %86 : vector<1x128xf32>
    %c10 = arith.constant 10 : index
    %88 = memref.load %arg2[%c10] : memref<16xf32, #tpu.memory_space<smem>>
    %89 = vector.broadcast %88 : f32 to vector<1x128xf32>
    %90 = arith.mulf %1, %89 : vector<1x128xf32>
    %c11 = arith.constant 11 : index
    %91 = memref.load %arg2[%c11] : memref<16xf32, #tpu.memory_space<smem>>
    %92 = vector.broadcast %91 : f32 to vector<1x128xf32>
    %93 = arith.mulf %3, %92 : vector<1x128xf32>
    %94 = arith.addf %90, %93 : vector<1x128xf32>
    %c5_22 = arith.constant 5 : index
    %95 = memref.load %arg3[%c5_22] : memref<8xf32, #tpu.memory_space<smem>>
    %96 = vector.broadcast %95 : f32 to vector<1x128xf32>
    %97 = arith.addf %94, %96 : vector<1x128xf32>
    %cst_23 = arith.constant 0.000000e+00 : f32
    %98 = vector.broadcast %cst_23 : f32 to vector<1x128xf32>
    %99 = arith.maximumf %97, %98 : vector<1x128xf32>
    %c5_24 = arith.constant 5 : index
    %100 = memref.load %arg4[%c5_24] : memref<8xf32, #tpu.memory_space<smem>>
    %101 = vector.broadcast %100 : f32 to vector<1x128xf32>
    %102 = arith.mulf %101, %99 : vector<1x128xf32>
    %103 = arith.addf %87, %102 : vector<1x128xf32>
    %c12 = arith.constant 12 : index
    %104 = memref.load %arg2[%c12] : memref<16xf32, #tpu.memory_space<smem>>
    %105 = vector.broadcast %104 : f32 to vector<1x128xf32>
    %106 = arith.mulf %1, %105 : vector<1x128xf32>
    %c13 = arith.constant 13 : index
    %107 = memref.load %arg2[%c13] : memref<16xf32, #tpu.memory_space<smem>>
    %108 = vector.broadcast %107 : f32 to vector<1x128xf32>
    %109 = arith.mulf %3, %108 : vector<1x128xf32>
    %110 = arith.addf %106, %109 : vector<1x128xf32>
    %c6_25 = arith.constant 6 : index
    %111 = memref.load %arg3[%c6_25] : memref<8xf32, #tpu.memory_space<smem>>
    %112 = vector.broadcast %111 : f32 to vector<1x128xf32>
    %113 = arith.addf %110, %112 : vector<1x128xf32>
    %cst_26 = arith.constant 0.000000e+00 : f32
    %114 = vector.broadcast %cst_26 : f32 to vector<1x128xf32>
    %115 = arith.maximumf %113, %114 : vector<1x128xf32>
    %c6_27 = arith.constant 6 : index
    %116 = memref.load %arg4[%c6_27] : memref<8xf32, #tpu.memory_space<smem>>
    %117 = vector.broadcast %116 : f32 to vector<1x128xf32>
    %118 = arith.mulf %117, %115 : vector<1x128xf32>
    %119 = arith.addf %103, %118 : vector<1x128xf32>
    %c14 = arith.constant 14 : index
    %120 = memref.load %arg2[%c14] : memref<16xf32, #tpu.memory_space<smem>>
    %121 = vector.broadcast %120 : f32 to vector<1x128xf32>
    %122 = arith.mulf %1, %121 : vector<1x128xf32>
    %c15 = arith.constant 15 : index
    %123 = memref.load %arg2[%c15] : memref<16xf32, #tpu.memory_space<smem>>
    %124 = vector.broadcast %123 : f32 to vector<1x128xf32>
    %125 = arith.mulf %3, %124 : vector<1x128xf32>
    %126 = arith.addf %122, %125 : vector<1x128xf32>
    %c7_28 = arith.constant 7 : index
    %127 = memref.load %arg3[%c7_28] : memref<8xf32, #tpu.memory_space<smem>>
    %128 = vector.broadcast %127 : f32 to vector<1x128xf32>
    %129 = arith.addf %126, %128 : vector<1x128xf32>
    %cst_29 = arith.constant 0.000000e+00 : f32
    %130 = vector.broadcast %cst_29 : f32 to vector<1x128xf32>
    %131 = arith.maximumf %129, %130 : vector<1x128xf32>
    %c7_30 = arith.constant 7 : index
    %132 = memref.load %arg4[%c7_30] : memref<8xf32, #tpu.memory_space<smem>>
    %133 = vector.broadcast %132 : f32 to vector<1x128xf32>
    %134 = arith.mulf %133, %131 : vector<1x128xf32>
    %135 = arith.addf %119, %134 : vector<1x128xf32>
    %cst_31 = arith.constant 0.000000e+00 : f32
    %136 = vector.broadcast %cst_31 : f32 to vector<1x128xf32>
    %137 = arith.subf %136, %135 : vector<1x128xf32>
    %138 = math.exp %137 : vector<1x128xf32>
    %cst_32 = arith.constant 1.000000e+00 : f32
    %139 = vector.broadcast %cst_32 : f32 to vector<1x128xf32>
    %140 = arith.addf %139, %138 : vector<1x128xf32>
    %141 = tpu.reciprocal %140 {approx = true} : vector<1x128xf32> -> vector<1x128xf32>
    %c0_33 = arith.constant 0 : index
    %c0_34 = arith.constant 0 : index
    %142 = vector.load %arg6[%c0_33, %c0_34] : memref<1x128xf32, #tpu.memory_space<vmem>>, vector<1x128xf32>
    tpu.vector_store %arg6[%c0_33, %c0_34], %141 {strides = array<i32>} : memref<1x128xf32, #tpu.memory_space<vmem>>, vector<1x128xf32>,
    return
  }
  func.func @transform_0(%arg0: i32) -> (i32, i32, i32) {
    %c0_i32 = arith.constant 0 : i32
    %c0_i32_0 = arith.constant 0 : i32
    %c0_i32_1 = arith.constant 0 : i32
    return %c0_i32, %arg0, %c0_i32_0 : i32, i32, i32
  }
  func.func @transform_1(%arg0: i32) -> i32 {
    %c0_i32 = arith.constant 0 : i32
    %c0_i32_0 = arith.constant 0 : i32
    return %c0_i32 : i32
  }
  func.func @transform_2(%arg0: i32) -> i32 {
    %c0_i32 = arith.constant 0 : i32
    %c0_i32_0 = arith.constant 0 : i32
    return %c0_i32 : i32
  }
  func.func @transform_3(%arg0: i32) -> i32 {
    %c0_i32 = arith.constant 0 : i32
    %c0_i32_0 = arith.constant 0 : i32
    return %c0_i32 : i32
  }
  func.func @transform_4(%arg0: i32) -> i32 {
    %c0_i32 = arith.constant 0 : i32
    %c0_i32_0 = arith.constant 0 : i32
    return %c0_i32 : i32
  }
  func.func @transform_5(%arg0: i32) -> (i32, i32) {
    %c0_i32 = arith.constant 0 : i32
    %c0_i32_0 = arith.constant 0 : i32
    return %arg0, %c0_i32 : i32, i32
  }
}

</mosaic_0001>

<llo_original>
// kernel: shallow_network_forward.1
$region0: #{shallow_network_forward.1}
  #allocation0 [shape = 'u32[]', space=smem, size = 0x4, offset = 0x4, fixed_abs, tag = 'smem constant byte address 0x4 - core index']
  #allocation1 [shape = 'u32[144,128]{1,0:T(1,128)}', space=vmem, size = 0x12000, scoped, tag = 'internal scratch']
  #allocation2 [shape = 'f32[1]{0:T(128)S(6)}', space=smem, size = 0x200, scoped, tag = 'scoped memory for shallow_network_forward.1']
  %s0 = inlined_call_operand.vmem [shape: f32[2,1,128], index: 0, kind: input, shape index: {}]
  %s1 = inlined_call_operand.vmem [shape: f32[16], index: 1, kind: input, shape index: {}]
  %s2 = inlined_call_operand.vmem [shape: f32[8], index: 2, kind: input, shape index: {}]
  %s3 = inlined_call_operand.vmem [shape: f32[8], index: 3, kind: input, shape index: {}]
  %s4 = inlined_call_operand.<no memory space> [shape: f32[1], index: 4, kind: input, shape index: {}]
  %s5 = inlined_call_operand.vmem [shape: f32[1,128], index: 5, kind: output, shape index: {}]
  %s6 = sld [smem:[#allocation0]]
  $region42: #{shallow_network_forward.1} parent=0
    _
  %s8 = ssub.s32 1, %s6
  %s9 = scalar_select 0, %s8, %s6
  %10 = sst [smem:[#allocation2]] %s4
  $region1: #{shallow_network_forward.1} parent=0
    #allocation3 [shape = 'u8[512]{0}', space=smem, size = 0x200, scoped, tag = 'input window, operand 1, single buffered']
    #allocation4 [shape = 's32[1]{0}', space=sflag, size = 0x4, scoped, tag = 'scoped memory for shallow_network_forward.1']
    #allocation5 [shape = 'u8[512]{0}', space=smem, size = 0x200, scoped, tag = 'input window, operand 2, single buffered']
    #allocation6 [shape = 's32[1]{0}', space=sflag, size = 0x4, scoped, tag = 'scoped memory for shallow_network_forward.1']
    #allocation7 [shape = 'u8[512]{0}', space=smem, size = 0x200, scoped, tag = 'input window, operand 3, single buffered']
    %11 = vsyncpa [#allocation4], 0
    %12 = vsyncpa [#allocation6], 0
    // Predicated region
    $region2: #{shallow_network_forward.1} parent=1 // pred_check
      _
    $region3: #{shallow_network_forward.1} parent=1 // pred_check_branch
      %14 = sbr.rel (0) target = $region5
    $region4: #{shallow_network_forward.1} parent=1 // pred_region
      _
    $region5: #{shallow_network_forward.1} parent=1 // pred_fallthru
      _
    // Predicated region
    $region6: #{shallow_network_forward.1} parent=1 // pred_check
      _
    $region7: #{shallow_network_forward.1} parent=1 // pred_check_branch
      %16 = sbr.rel (0) target = $region9
    $region8: #{shallow_network_forward.1} parent=1 // pred_region
      %s18 = ssub.s32 16, 16
      %19 = vsyncadd [#allocation4], %s18
      %s21 = sshll.u32 %s1, 4
      %s22 = int_to_ptr.vmem [resolvable:$true] %s21
      %24 = dma.vmem_to_smem %s22, 16, [#allocation3], [#allocation4]
    $region9: #{shallow_network_forward.1} parent=1 // pred_fallthru
      _
    // Predicated region
    $region10: #{shallow_network_forward.1} parent=1 // pred_check
      _
    $region11: #{shallow_network_forward.1} parent=1 // pred_check_branch
      %26 = sbr.rel (0) target = $region13
    $region12: #{shallow_network_forward.1} parent=1 // pred_region
      %s28 = ssub.s32 16, 16
      %29 = vsyncadd [#allocation6], %s28
      %s31 = sshll.u32 %s2, 4
      %s32 = int_to_ptr.vmem [resolvable:$true] %s31
      %34 = dma.vmem_to_smem %s32, 16, [#allocation5], [#allocation6]
    $region13: #{shallow_network_forward.1} parent=1 // pred_fallthru
      _
    // Predicated region
    $region14: #{shallow_network_forward.1} parent=1 // pred_check
      _
    $region15: #{shallow_network_forward.1} parent=1 // pred_check_branch
      %36 = sbr.rel (0) target = $region17
    $region16: #{shallow_network_forward.1} parent=1 // pred_region
      %s38 = ssub.s32 16, 16
      %39 = vsyncadd [#allocation6], %s38
      %s41 = sshll.u32 %s3, 4
      %s42 = int_to_ptr.vmem [resolvable:$true] %s41
      %44 = dma.vmem_to_smem %s42, 16, [#allocation7], [#allocation6]
    $region17: #{shallow_network_forward.1} parent=1 // pred_fallthru
      _
    // Predicated region
    $region18: #{shallow_network_forward.1} parent=1 // pred_check
      _
    $region19: #{shallow_network_forward.1} parent=1 // pred_check_branch
      %46 = sbr.rel (0) target = $region21
    $region20: #{shallow_network_forward.1} parent=1 // pred_region
      _
    $region21: #{shallow_network_forward.1} parent=1 // pred_fallthru
      _
    // Predicated region
    $region22: #{shallow_network_forward.1} parent=1 // pred_check
      _
    $region23: #{shallow_network_forward.1} parent=1 // pred_check_branch
      %48 = sbr.rel (0) target = $region25
    $region24: #{shallow_network_forward.1} parent=1 // pred_region
      %49 = dma.done [#allocation4], 16
    $region25: #{shallow_network_forward.1} parent=1 // pred_fallthru
      _
    // Predicated region
    $region26: #{shallow_network_forward.1} parent=1 // pred_check
      _
    $region27: #{shallow_network_forward.1} parent=1 // pred_check_branch
      %51 = sbr.rel (0) target = $region29
    $region28: #{shallow_network_forward.1} parent=1 // pred_region
      %52 = dma.done [#allocation6], 16
    $region29: #{shallow_network_forward.1} parent=1 // pred_fallthru
      _
    // Predicated region
    $region30: #{shallow_network_forward.1} parent=1 // pred_check
      _
    $region31: #{shallow_network_forward.1} parent=1 // pred_check_branch
      %54 = sbr.rel (0) target = $region33
    $region32: #{shallow_network_forward.1} parent=1 // pred_region
      %55 = dma.done [#allocation6], 16
    $region33: #{shallow_network_forward.1} parent=1 // pred_fallthru
      _
    %56 = sfence
    %v57 = vld [vmem:[%s0] sm:$0x1]
    %s58 = scalar_lea.vmem %s0, 1
    %v59 = vld [vmem:[%s58] sm:$0x1]
    %s60 = sld [smem:[#allocation2]]
    %v61 = vstv %s60
    %v62 = vadd.f32 %v61, 0.0
    %s63 = sld [smem:[#allocation3]]
    %v64 = vstv %s63
    %v65 = vmul.f32 %v57, %v64
    %s66 = sld [smem:[#allocation3 + $0x1]]
    %v67 = vstv %s66
    %v68 = vmul.f32 %v59, %v67
    %v69 = vadd.f32 %v65, %v68
    %s70 = sld [smem:[#allocation5]]
    %v71 = vstv %s70
    %v72 = vadd.f32 %v69, %v71
    %v73 = vmax.f32 %v72, 0.0
    %s74 = sld [smem:[#allocation7]]
    %v75 = vstv %s74
    %v76 = vmul.f32 %v75, %v73
    %v77 = vadd.f32 %v62, %v76
    %s78 = sld [smem:[#allocation3 + $0x2]]
    %v79 = vstv %s78
    %v80 = vmul.f32 %v57, %v79
    %s81 = sld [smem:[#allocation3 + $0x3]]
    %v82 = vstv %s81
    %v83 = vmul.f32 %v59, %v82
    %v84 = vadd.f32 %v80, %v83
    %s85 = sld [smem:[#allocation5 + $0x1]]
    %v86 = vstv %s85
    %v87 = vadd.f32 %v84, %v86
    %v88 = vmax.f32 %v87, 0.0
    %s89 = sld [smem:[#allocation7 + $0x1]]
    %v90 = vstv %s89
    %v91 = vmul.f32 %v90, %v88
    %v92 = vadd.f32 %v77, %v91
    %s93 = sld [smem:[#allocation3 + $0x4]]
    %v94 = vstv %s93
    %v95 = vmul.f32 %v57, %v94
    %s96 = sld [smem:[#allocation3 + $0x5]]
    %v97 = vstv %s96
    %v98 = vmul.f32 %v59, %v97
    %v99 = vadd.f32 %v95, %v98
    %s100 = sld [smem:[#allocation5 + $0x2]]
    %v101 = vstv %s100
    %v102 = vadd.f32 %v99, %v101
    %v103 = vmax.f32 %v102, 0.0
    %s104 = sld [smem:[#allocation7 + $0x2]]
    %v105 = vstv %s104
    %v106 = vmul.f32 %v105, %v103
    %v107 = vadd.f32 %v92, %v106
    %s108 = sld [smem:[#allocation3 + $0x6]]
    %v109 = vstv %s108
    %v110 = vmul.f32 %v57, %v109
    %s111 = sld [smem:[#allocation3 + $0x7]]
    %v112 = vstv %s111
    %v113 = vmul.f32 %v59, %v112
    %v114 = vadd.f32 %v110, %v113
    %s115 = sld [smem:[#allocation5 + $0x3]]
    %v116 = vstv %s115
    %v117 = vadd.f32 %v114, %v116
    %v118 = vmax.f32 %v117, 0.0
    %s119 = sld [smem:[#allocation7 + $0x3]]
    %v120 = vstv %s119
    %v121 = vmul.f32 %v120, %v118
    %v122 = vadd.f32 %v107, %v121
    %s123 = sld [smem:[#allocation3 + $0x8]]
    %v124 = vstv %s123
    %v125 = vmul.f32 %v57, %v124
    %s126 = sld [smem:[#allocation3 + $0x9]]
    %v127 = vstv %s126
    %v128 = vmul.f32 %v59, %v127
    %v129 = vadd.f32 %v125, %v128
    %s130 = sld [smem:[#allocation5 + $0x4]]
    %v131 = vstv %s130
    %v132 = vadd.f32 %v129, %v131
    %v133 = vmax.f32 %v132, 0.0
    %s134 = sld [smem:[#allocation7 + $0x4]]
    %v135 = vstv %s134
    %v136 = vmul.f32 %v135, %v133
    %v137 = vadd.f32 %v122, %v136
    %s138 = sld [smem:[#allocation3 + $0xa]]
    %v139 = vstv %s138
    %v140 = vmul.f32 %v57, %v139
    %s141 = sld [smem:[#allocation3 + $0xb]]
    %v142 = vstv %s141
    %v143 = vmul.f32 %v59, %v142
    %v144 = vadd.f32 %v140, %v143
    %s145 = sld [smem:[#allocation5 + $0x5]]
    %v146 = vstv %s145
    %v147 = vadd.f32 %v144, %v146
    %v148 = vmax.f32 %v147, 0.0
    %s149 = sld [smem:[#allocation7 + $0x5]]
    %v150 = vstv %s149
    %v151 = vmul.f32 %v150, %v148
    %v152 = vadd.f32 %v137, %v151
    %s153 = sld [smem:[#allocation3 + $0xc]]
    %v154 = vstv %s153
    %v155 = vmul.f32 %v57, %v154
    %s156 = sld [smem:[#allocation3 + $0xd]]
    %v157 = vstv %s156
    %v158 = vmul.f32 %v59, %v157
    %v159 = vadd.f32 %v155, %v158
    %s160 = sld [smem:[#allocation5 + $0x6]]
    %v161 = vstv %s160
    %v162 = vadd.f32 %v159, %v161
    %v163 = vmax.f32 %v162, 0.0
    %s164 = sld [smem:[#allocation7 + $0x6]]
    %v165 = vstv %s164
    %v166 = vmul.f32 %v165, %v163
    %v167 = vadd.f32 %v152, %v166
    %s168 = sld [smem:[#allocation3 + $0xe]]
    %v169 = vstv %s168
    %v170 = vmul.f32 %v57, %v169
    %s171 = sld [smem:[#allocation3 + $0xf]]
    %v172 = vstv %s171
    %v173 = vmul.f32 %v59, %v172
    %v174 = vadd.f32 %v170, %v173
    %s175 = sld [smem:[#allocation5 + $0x7]]
    %v176 = vstv %s175
    %v177 = vadd.f32 %v174, %v176
    %v178 = vmax.f32 %v177, 0.0
    %s179 = sld [smem:[#allocation7 + $0x7]]
    %v180 = vstv %s179
    %v181 = vmul.f32 %v180, %v178
    %v182 = vadd.f32 %v167, %v181
    %v183 = vsub.f32 0.0, %v182
    %v184 = vmul.f32 %v183, 1.442695
    %v185 = vpow.pop %v184
    %v186 = vadd.f32 %v185, 1.0
    %v187 = vrcp.pop %v186
    %188 = vst [vmem:[%s5] sm:$0x1] %v187
    // Predicated region
    $region34: #{shallow_network_forward.1} parent=1 // pred_check
      _
    $region35: #{shallow_network_forward.1} parent=1 // pred_check_branch
      %190 = sbr.rel (0) target = $region37
    $region36: #{shallow_network_forward.1} parent=1 // pred_region
      _
    $region37: #{shallow_network_forward.1} parent=1 // pred_fallthru
      _
    // Predicated region
    $region38: #{shallow_network_forward.1} parent=1 // pred_check
      _
    $region39: #{shallow_network_forward.1} parent=1 // pred_check_branch
      %192 = sbr.rel (0) target = $region41
    $region40: #{shallow_network_forward.1} parent=1 // pred_region
      _
    $region41: #{shallow_network_forward.1} parent=1 // pred_fallthru
      _
    %193 = vsyncpa [#allocation4], 1
    %194 = vsyncpa [#allocation6], 1

</llo_original>
